<compile_context>
chip_gen: v5e
topology: v5e:2x2
jax: 0.10.0
libtpu: 0.0.40
codegen_flags: <defaults>
</compile_context>

<pallas_src>
import numpy as np
import jax
import jax.numpy as jnp
from jax.experimental import pallas as pl
from jax.experimental.pallas import tpu as pltpu


_FASTPATH_BYTES = 64 * 1024        # below this, skip Pallas entirely (launch-bound)
_SINGLE_STEP_BYTES = 256 * 1024    # below this, one grid step (pipelining can't help)
_MIN_PIPELINE_STEPS = 8            # target grid steps for DMA overlap / 2-TC split


def make_sinusoid_table(n_position: int, d_hid: int) -> jnp.ndarray:
    """Deterministic sinusoid position encoding table, shape (n_position, d_hid)."""
    pos = np.arange(n_position, dtype=np.float64)[:, None]            # (P, 1)
    hid = np.arange(d_hid, dtype=np.int64)[None, :]                    # (1, D)
    angle = pos / np.power(10000.0, 2.0 * (hid // 2) / float(d_hid))   # (P, D)
    table = np.zeros((n_position, d_hid), dtype=np.float64)
    table[:, 0::2] = np.sin(angle[:, 0::2])
    table[:, 1::2] = np.cos(angle[:, 1::2])
    return jnp.asarray(table, dtype=jnp.float32)


def _round_down(v: int, m: int) -> int:
    return (v // m) * m


def _vmem_budgets():
    """Return (tile_budget_bytes, vmem_limit_bytes), gated on chip generation."""
    vmem_cap = 64 * 1024 * 1024                       # conservative default (v7x/TC)
    try:
        info = pltpu.get_tpu_info()
        cap = getattr(info, "vmem_capacity_bytes", None)
        if cap:
            vmem_cap = int(cap)
    except Exception:
        pass
    if vmem_cap >= 96 * 1024 * 1024:                  # v5e / v6e: 128 MiB physical
        return 8 * 1024 * 1024, 64 * 1024 * 1024
    return 4 * 1024 * 1024, 48 * 1024 * 1024          # v7x (64 MiB/TC) or unknown


def _choose_tiles(B: int, L: int, itemsize: int, tile_budget: int):
    """Pick (tb, tl): tb a multiple of 8 (or == B), tl a multiple of 128 (or == L),
    tile bytes <= tile_budget, and >= _MIN_PIPELINE_STEPS grid steps whenever the
    problem is large enough for pipelining to matter."""
    total_bytes = B * L * itemsize
    if total_bytes <= _SINGLE_STEP_BYTES:
        return B, L                                   # one grid step; overhead-bound

    bytes_per_row = L * itemsize
    if B >= 8 and 8 * bytes_per_row <= tile_budget:
        # Row-only tiling; lane axis stays full width (lane-dense stores).
        rows_budget = max(8, _round_down(tile_budget // bytes_per_row, 8))
        rows_for_steps = max(8, _round_down(-(-B // _MIN_PIPELINE_STEPS) + 7, 8))
        return min(rows_budget, rows_for_steps), L

    # Few rows or very long rows: tile the lane axis too (multiples of 128).
    tb = B if B < 8 else 8
    tl = min(L, max(128, _round_down(tile_budget // (tb * itemsize), 128)))
    while tl > 128 and pl.cdiv(B, tb) * pl.cdiv(L, tl) < _MIN_PIPELINE_STEPS:
        tl = max(128, _round_down(tl // 2, 128))
    return tb, tl


def _pos_add_kernel(x_ref, pos_ref, o_ref):
    # x_ref / o_ref: (tb, tl) tile of the flattened (B, S*D) slab.
    # pos_ref:       (1, tl) sinusoid slice; constant row block index keeps it
    #                resident in VMEM across row-tile steps; (1, tl) -> (tb, tl)
    #                is a cheap sublane broadcast.  No reshapes in-body.
    o_ref[...] = x_ref[...] + pos_ref[...]


def positional_encoding(x: jnp.ndarray, pos_table: jnp.ndarray,
                        *, force_pallas: bool = False,
                        donate_x: bool = False) -> jnp.ndarray:
    """x: (B, S, D) float32; pos_table: (n_position, D) float32."""
    B, S, D = x.shape
    L = S * D
    itemsize = x.dtype.itemsize
    total_bytes = B * L * itemsize

    # Fast path: tiny problems are launch-overhead dominated; a plain jnp add
    # fuses into neighboring XLA ops (or the downstream matmul epilogue) for free.
    if not force_pallas and total_bytes <= _FASTPATH_BYTES:
        return x + pos_table[None, :S, :].astype(x.dtype)

    # Wrapper-side layout plumbing (free): lane-dense flattening of (S, D).
    x2d = x.reshape(B, L)
    pos2d = pos_table[:S, :].astype(x.dtype).reshape(1, L)

    tile_budget, vmem_limit = _vmem_budgets()
    tb, tl = _choose_tiles(B, L, itemsize, tile_budget)
    grid = (pl.cdiv(B, tb), pl.cdiv(L, tl))

    cost = pl.CostEstimate(
        flops=B * L,
        transcendentals=0,
        bytes_accessed=2 * B * L * itemsize + L * itemsize,
    )

    out2d = pl.pallas_call(
        _pos_add_kernel,
        out_shape=jax.ShapeDtypeStruct((B, L), x.dtype),
        grid_spec=pltpu.PrefetchScalarGridSpec(
            num_scalar_prefetch=0,
            grid=grid,
            in_specs=[
                pl.BlockSpec((tb, tl), lambda i, j: (i, j)),
                pl.BlockSpec((1, tl), lambda i, j: (0, j)),   # resident pos slice
            ],
            out_specs=pl.BlockSpec((tb, tl), lambda i, j: (i, j)),
        ),
        compiler_params=pltpu.CompilerParams(
            dimension_semantics=("parallel", "arbitrary"),    # row tiles split across TCs
            vmem_limit_bytes=vmem_limit,
        ),
        cost_estimate=cost,
        input_output_aliases=({0: 0} if donate_x else {}),
    )(x2d, pos2d)

    return out2d.reshape(B, S, D)


if __name__ == "__main__":
    # Module-consistent config: d_hid=32, n_position=200. Input: batch=2, seq=8.
    d_hid = 32
    n_position = 200
    B, S = 2, 8

    pos_table = make_sinusoid_table(n_position, d_hid)
    key = jax.random.PRNGKey(0)
    x = jax.random.normal(key, (B, S, d_hid), dtype=jnp.float32)
    ref = x + pos_table[None, :S, :]

    # (a) default path: tiny shape takes the XLA-fused fast path.
    out_fast = jax.block_until_ready(positional_encoding(x, pos_table))
    # (b) forced Pallas path: exercises the single-grid-step kernel.
    out_pallas = jax.block_until_ready(positional_encoding(x, pos_table, force_pallas=True))

    assert out_fast.shape == (B, S, d_hid) and out_pallas.shape == (B, S, d_hid)
    np.testing.assert_allclose(np.asarray(out_fast), np.asarray(ref), rtol=1e-6, atol=1e-6)
    np.testing.assert_allclose(np.asarray(out_pallas), np.asarray(ref), rtol=1e-6, atol=1e-6)

    # (c) larger batch: exercises the pipelined, row-tiled path (>= 8 grid steps).
    B2 = 1024
    x2 = jax.random.normal(jax.random.PRNGKey(1), (B2, S, d_hid), dtype=jnp.float32)
    out2 = jax.block_until_ready(positional_encoding(x2, pos_table))
    ref2 = x2 + pos_table[None, :S, :]
    np.testing.assert_allclose(np.asarray(out2), np.asarray(ref2), rtol=1e-6, atol=1e-6)

    print("KERNEL_OK")
</pallas_src>

<mosaic_0001>
module attributes {stable_mosaic.version = 11 : i64} {
  func.func @_pos_add_kernel(%arg0: i32, %arg1: i32, %arg2: memref<2x256xf32, #tpu.memory_space<vmem>>, %arg3: memref<1x256xf32, #tpu.memory_space<vmem>>, %arg4: memref<2x256xf32, #tpu.memory_space<vmem>>) attributes {dimension_semantics = [#tpu.dimension_semantics<parallel>, #tpu.dimension_semantics<arbitrary>], iteration_bounds = array<i64: 1, 1>, scalar_prefetch = 0 : i64, scratch_operands = 0 : i64, tpu.core_type = #tpu.core_type<tc>, window_params = [{transform_indices = @transform_0, window_bounds = array<i64: 2, 256>}, {transform_indices = @transform_1, window_bounds = array<i64: 1, 256>}, {transform_indices = @transform_2, window_bounds = array<i64: 2, 256>}]} {
    %c0 = arith.constant 0 : index
    %c0_0 = arith.constant 0 : index
    %0 = vector.load %arg2[%c0, %c0_0] : memref<2x256xf32, #tpu.memory_space<vmem>>, vector<2x256xf32>
    %c0_1 = arith.constant 0 : index
    %c0_2 = arith.constant 0 : index
    %1 = vector.load %arg3[%c0_1, %c0_2] : memref<1x256xf32, #tpu.memory_space<vmem>>, vector<1x256xf32>
    %2 = vector.broadcast %1 : vector<1x256xf32> to vector<2x256xf32>
    %3 = arith.addf %0, %2 : vector<2x256xf32>
    %c0_3 = arith.constant 0 : index
    %c0_4 = arith.constant 0 : index
    %4 = vector.load %arg4[%c0_3, %c0_4] : memref<2x256xf32, #tpu.memory_space<vmem>>, vector<2x256xf32>
    tpu.vector_store %arg4[%c0_3, %c0_4], %3 {strides = array<i32>} : memref<2x256xf32, #tpu.memory_space<vmem>>, vector<2x256xf32>,
    return
  }
  func.func @transform_0(%arg0: i32, %arg1: i32) -> (i32, i32) {
    %c0_i32 = arith.constant 0 : i32
    return %arg0, %arg1 : i32, i32
  }
  func.func @transform_1(%arg0: i32, %arg1: i32) -> (i32, i32) {
    %c0_i32 = arith.constant 0 : i32
    %c0_i32_0 = arith.constant 0 : i32
    return %c0_i32, %arg1 : i32, i32
  }
  func.func @transform_2(%arg0: i32, %arg1: i32) -> (i32, i32) {
    %c0_i32 = arith.constant 0 : i32
    return %arg0, %arg1 : i32, i32
  }
}

</mosaic_0001>

<llo_original>
// kernel: tpu_custom_call.1
$region0: #{tpu_custom_call.1}
  #allocation0 [shape = 'u32[]', space=smem, size = 0x4, offset = 0x4, fixed_abs, tag = 'smem constant byte address 0x4 - core index']
  #allocation1 [shape = 'u32[72,128]{1,0:T(1,128)}', space=vmem, size = 0x9000, scoped, tag = 'internal scratch']
  %s0 = inlined_call_operand.hbm [shape: f32[2,256], index: 0, kind: input, shape index: {}]
  %s1 = inlined_call_operand.hbm [shape: f32[1,256], index: 1, kind: input, shape index: {}]
  %s2 = inlined_call_operand.hbm [shape: f32[2,256], index: 2, kind: output, shape index: {}]
  %s3 = sld [smem:[#allocation0]]
  $region26: #{tpu_custom_call.1} parent=0
    _
  %s5 = ssub.s32 1, %s3
  %s6 = scalar_select 0, %s5, %s3
  $region1: #{tpu_custom_call.1} parent=0
    #allocation2 [shape = 'u8[2048]{0}', space=vmem, size = 0x800, scoped, tag = 'input window, operand 0, single buffered']
    #allocation3 [shape = 's32[1]{0}', space=sflag, size = 0x4, scoped, tag = 'scoped memory for tpu_custom_call.1']
    #allocation4 [shape = 's32[1]{0}', space=sflag, size = 0x4, scoped, tag = 'scoped memory for tpu_custom_call.1']
    #allocation5 [shape = 'u8[1024]{0}', space=vmem, size = 0x400, scoped, tag = 'input window, operand 1, single buffered']
    #allocation6 [shape = 's32[1]{0}', space=sflag, size = 0x4, scoped, tag = 'scoped memory for tpu_custom_call.1']
    #allocation7 [shape = 'u8[2048]{0}', space=vmem, size = 0x800, scoped, tag = 'output window, operand 0, single buffered']
    %7 = vsyncpa [#allocation3], 0
    %8 = vsyncpa [#allocation6], 0
    %9 = vsyncpa [#allocation4], 0
    // Predicated region
    $region2: #{tpu_custom_call.1} parent=1 // pred_check
      _
    $region3: #{tpu_custom_call.1} parent=1 // pred_check_branch
      %11 = sbr.rel (0) target = $region5
    $region4: #{tpu_custom_call.1} parent=1 // pred_region
      %13 = vsyncadd [#allocation3], 0
      %s15 = sshll.u32 %s0, 4
      %s16 = int_to_ptr.hbm [resolvable:$true] %s15
      %s17 = sshll.u32 [#allocation2], 4
      %s18 = int_to_ptr.vmem [resolvable:$true] %s17
      %20 = dma.hbm_to_vmem [thread:$0]  %s16, 64, %s18, [#allocation3]
    $region5: #{tpu_custom_call.1} parent=1 // pred_fallthru
      _
    // Predicated region
    $region6: #{tpu_custom_call.1} parent=1 // pred_check
      _
    $region7: #{tpu_custom_call.1} parent=1 // pred_check_branch
      %22 = sbr.rel (0) target = $region9
    $region8: #{tpu_custom_call.1} parent=1 // pred_region
      %24 = vsyncadd [#allocation6], 0
      %s26 = sshll.u32 %s1, 4
      %s27 = int_to_ptr.hbm [resolvable:$true] %s26
      %s28 = sshll.u32 [#allocation5], 4
      %s29 = int_to_ptr.vmem [resolvable:$true] %s28
      %31 = dma.hbm_to_vmem [thread:$0]  %s27, 32, %s29, [#allocation6]
    $region9: #{tpu_custom_call.1} parent=1 // pred_fallthru
      _
    // Predicated region
    $region10: #{tpu_custom_call.1} parent=1 // pred_check
      _
    $region11: #{tpu_custom_call.1} parent=1 // pred_check_branch
      %33 = sbr.rel (0) target = $region13
    $region12: #{tpu_custom_call.1} parent=1 // pred_region
      %35 = dma.done [#allocation3], 64
    $region13: #{tpu_custom_call.1} parent=1 // pred_fallthru
      _
    // Predicated region
    $region14: #{tpu_custom_call.1} parent=1 // pred_check
      _
    $region15: #{tpu_custom_call.1} parent=1 // pred_check_branch
      %37 = sbr.rel (0) target = $region17
    $region16: #{tpu_custom_call.1} parent=1 // pred_region
      %39 = dma.done [#allocation6], 32
    $region17: #{tpu_custom_call.1} parent=1 // pred_fallthru
      _
    %v40 = vld [vmem:[#allocation2] sm:$0xf]
    %v41 = vld [vmem:[#allocation5] sm:$0x3]
    %v43 = vperm.slane %v41, 0
    %v44 = vperm.slane %v41, 1
    %v45 = vrot.slane %v44, 6
    %vm46 = vcmask 1041408
    %v47 = vsel %vm46, %v43, %v45
    %v49 = vadd.f32 %v40, %v47
    %50 = vst [vmem:[#allocation7] sm:$0xf] %v49
    // Predicated region
    $region18: #{tpu_custom_call.1} parent=1 // pred_check
      _
    $region19: #{tpu_custom_call.1} parent=1 // pred_check_branch
      %52 = sbr.rel (0) target = $region21
    $region20: #{tpu_custom_call.1} parent=1 // pred_region
      %54 = vsyncadd [#allocation4], 0
      %s56 = sshll.u32 [#allocation7], 4
      %s57 = int_to_ptr.vmem [resolvable:$true] %s56
      %s58 = sshll.u32 %s2, 4
      %s59 = int_to_ptr.hbm [resolvable:$true] %s58
      %61 = dma.vmem_to_hbm [thread:$0]  %s57, 64, %s59, [#allocation4]
    $region21: #{tpu_custom_call.1} parent=1 // pred_fallthru
      _
    // Predicated region
    $region22: #{tpu_custom_call.1} parent=1 // pred_check
      _
    $region23: #{tpu_custom_call.1} parent=1 // pred_check_branch
      %63 = sbr.rel (0) target = $region25
    $region24: #{tpu_custom_call.1} parent=1 // pred_region
      %65 = dma.done [#allocation4], 64
    $region25: #{tpu_custom_call.1} parent=1 // pred_fallthru
      _
    %66 = vsyncpa [#allocation3], 1
    %67 = vsyncpa [#allocation6], 1
    %68 = vsyncpa [#allocation4], 1

</llo_original>
